<compile_context>
chip_gen: v7x
topology: tpu7x:2x2x1
jax: 0.10.0
libtpu: 0.0.40
codegen_flags: <defaults>
</compile_context>

<pallas_src>
import math
import functools

import jax
import jax.numpy as jnp
from jax import lax
from jax.experimental import pallas as pl
from jax.experimental.pallas import tpu as pltpu

BN_EPS = 1e-5
VMEM_LIMIT_BYTES = 32 * 1024 * 1024   # explicit; safe on v5e/v6e/v7x (v7x phys 64 MiB)


# ----------------------------------------------------------------------------
# Pallas kernels
# ----------------------------------------------------------------------------
def _pointwise_conv_bn_relu_pool_kernel(x_ref, w_ref, shift_ref, o_ref, pool_ref,
                                        *, inv_hw):
    """1x1 cond-conv (+ fused BN shift, ReLU) on one (Cin, THW) spatial tile.

    x_ref:     (1, Cin, THW)  bf16 activation tile
    w_ref:     (1, Cout, Cin) bf16 per-sample expert-mixed weight (BN scale folded)
    shift_ref: (Cout, 1)      f32 fused BN shift
    o_ref:     (1, Cout, THW) f32 output tile
    pool_ref:  (1, Cout, 1)   f32 resident accumulator = mean over all HW tiles
    """
    h = pl.program_id(1)
    y = jnp.dot(w_ref[0], x_ref[0], preferred_element_type=jnp.float32)
    y = jnp.maximum(y + shift_ref[...], 0.0)
    o_ref[0] = y

    @pl.when(h == 0)
    def _():
        pool_ref[...] = jnp.zeros_like(pool_ref)

    # XLU lane-reduction; accumulates the fused global-average-pool of x1.
    pool_ref[0] = pool_ref[0] + jnp.sum(y, axis=-1, keepdims=True) * inv_hw


def _pick_hw_tile(hw, cin, cout, budget_bytes=24 * 1024 * 1024, max_tile=4096):
    """Largest lane-dense (multiple-of-128) divisor of `hw` whose
    double-buffered bf16-in / f32-out tiles fit the VMEM budget."""
    if hw % 128 != 0:
        return hw                                    # block == full dim (tiny inputs)
    bytes_per_lane = 2 * (2 * cin + 4 * cout)        # 2 buffers: bf16 in + f32 out
    cap = min(hw, max_tile, max(128, (budget_bytes // bytes_per_lane) // 128 * 128))
    for t in range(cap, 127, -128):
        if hw % t == 0:
            return t
    return hw


def pointwise_cond_conv_bn_relu(x_bf16, w_bf16, shift):
    """Returns (x1_flat (B, Cout, HW) f32, pooled (B, Cout) f32 mean over HW)."""
    B, Cin, HW = x_bf16.shape
    Cout = w_bf16.shape[1]
    thw = _pick_hw_tile(HW, Cin, Cout)
    n_hw = HW // thw
    kernel = functools.partial(_pointwise_conv_bn_relu_pool_kernel, inv_hw=1.0 / HW)
    out, pooled = pl.pallas_call(
        kernel,
        out_shape=(jax.ShapeDtypeStruct((B, Cout, HW), jnp.float32),
                   jax.ShapeDtypeStruct((B, Cout, 1), jnp.float32)),
        grid=(B, n_hw),
        in_specs=[
            pl.BlockSpec((1, Cin, thw), lambda b, h: (b, 0, h)),
            pl.BlockSpec((1, Cout, Cin), lambda b, h: (b, 0, 0)),   # resident weights
            pl.BlockSpec((Cout, 1), lambda b, h: (0, 0)),           # resident shift
        ],
        out_specs=(
            pl.BlockSpec((1, Cout, thw), lambda b, h: (b, 0, h)),
            pl.BlockSpec((1, Cout, 1), lambda b, h: (b, 0, 0)),     # pool accumulator
        ),
        compiler_params=pltpu.CompilerParams(
            dimension_semantics=("parallel", "arbitrary"),
            vmem_limit_bytes=VMEM_LIMIT_BYTES),
    )(x_bf16, w_bf16, shift)
    return out, pooled[:, :, 0]


def _depthwise3x3_bn_relu_kernel(x_ref, w_ref, shift_ref, o_ref, xh_ref,
                                 *, H, W, C):
    """3x3 depthwise cond-conv (+ fused BN shift, ReLU), flat lane-dense layout.

    x_ref:     (1, C, H*W)           f32 activation (flattened spatial on lanes)
    w_ref:     (1, C, 9)             f32 per-sample taps (BN scale folded)
    shift_ref: (C, 1)                f32 fused BN shift
    o_ref:     (1, C, H*W)           f32 output
    xh_ref:    (C, H*W + 2*(W + 1))  f32 VMEM scratch with zero halo
    """
    HW = H * W
    halo = W + 1
    # Zero-padded halo lives only in VMEM (no padded tensor in HBM).
    xh_ref[...] = jnp.zeros_like(xh_ref)
    xh_ref[:, halo:halo + HW] = x_ref[0]

    w = w_ref[0]                                               # (C, 9)
    col = lax.broadcasted_iota(jnp.int32, (1, HW), 1) % W
    not_left = col >= 1                                        # valid for dj == 0
    not_right = col <= W - 2                                   # valid for dj == 2

    acc = jnp.zeros((C, HW), jnp.float32)
    for di in range(3):
        for dj in range(3):
            s = (di - 1) * W + (dj - 1)
            win = xh_ref[:, halo + s:halo + s + HW]            # static lane shift
            if dj == 0:
                win = jnp.where(not_left, win, 0.0)
            elif dj == 2:
                win = jnp.where(not_right, win, 0.0)
            tap = w[:, di * 3 + dj:di * 3 + dj + 1]            # (C, 1)
            acc = acc + tap * win
    o_ref[0] = jnp.maximum(acc + shift_ref[...], 0.0)


def depthwise_cond_conv_bn_relu(x_flat, w_taps, shift, *, H, W):
    B, C, HW = x_flat.shape
    assert HW == H * W
    kernel = functools.partial(_depthwise3x3_bn_relu_kernel, H=H, W=W, C=C)
    return pl.pallas_call(
        kernel,
        out_shape=jax.ShapeDtypeStruct((B, C, HW), jnp.float32),
        grid=(B,),
        in_specs=[
            pl.BlockSpec((1, C, HW), lambda b: (b, 0, 0)),
            pl.BlockSpec((1, C, 9), lambda b: (b, 0, 0)),
            pl.BlockSpec((C, 1), lambda b: (0, 0)),
        ],
        out_specs=pl.BlockSpec((1, C, HW), lambda b: (b, 0, 0)),
        scratch_shapes=[pltpu.VMEM((C, HW + 2 * (W + 1)), jnp.float32)],
        compiler_params=pltpu.CompilerParams(
            dimension_semantics=("parallel",),
            vmem_limit_bytes=VMEM_LIMIT_BYTES),
    )(x_flat, w_taps, shift)


# ----------------------------------------------------------------------------
# Parameter construction (deterministic, synthetic)
# ----------------------------------------------------------------------------
def make_params(key, inp, oup, kernel_size=1, ratio=2, dw_size=3, num_experts=4):
    init_channels = math.ceil(oup / ratio)
    new_channels = init_channels * (ratio - 1)
    ks = jax.random.split(key, 16)

    def unif(k, shape, scale):
        return jax.random.uniform(k, shape, jnp.float32, -scale, scale)

    return dict(
        # primary DynamicConv (1x1, groups=1)
        route1_w=unif(ks[0], (num_experts, inp), 1.0 / math.sqrt(inp)),
        route1_b=unif(ks[1], (num_experts,), 1.0 / math.sqrt(inp)),
        expert1=unif(ks[2], (num_experts,
                             init_channels * inp * kernel_size * kernel_size),
                     1.0 / math.sqrt(inp * kernel_size * kernel_size)),
        bn1_gamma=jax.random.uniform(ks[3], (init_channels,), jnp.float32, 0.5, 1.5),
        bn1_beta=unif(ks[4], (init_channels,), 0.1),
        bn1_mean=unif(ks[5], (init_channels,), 0.1),
        bn1_var=jax.random.uniform(ks[6], (init_channels,), jnp.float32, 0.5, 1.5),
        # cheap DynamicConv (dw_size x dw_size, groups=init_channels)
        route2_w=unif(ks[7], (num_experts, init_channels),
                      1.0 / math.sqrt(init_channels)),
        route2_b=unif(ks[8], (num_experts,), 1.0 / math.sqrt(init_channels)),
        expert2=unif(ks[9], (num_experts, new_channels * 1 * dw_size * dw_size),
                     1.0 / math.sqrt(dw_size * dw_size)),
        bn2_gamma=jax.random.uniform(ks[10], (new_channels,), jnp.float32, 0.5, 1.5),
        bn2_beta=unif(ks[11], (new_channels,), 0.1),
        bn2_mean=unif(ks[12], (new_channels,), 0.1),
        bn2_var=jax.random.uniform(ks[13], (new_channels,), jnp.float32, 0.5, 1.5),
    )


def _fused_bn(gamma, beta, mean, var):
    scale = gamma / jnp.sqrt(var + BN_EPS)
    shift = beta - mean * scale
    return scale, shift


# ----------------------------------------------------------------------------
# GhostModule forward (Pallas)
# ----------------------------------------------------------------------------
def ghost_module_forward(params, x, *, oup, kernel_size=1, ratio=2, dw_size=3,
                         num_experts=4):
    assert kernel_size == 1 and dw_size == 3, "only default GhostModule config"
    B, Cin, H, W = x.shape
    init_channels = math.ceil(oup / ratio)
    new_channels = init_channels * (ratio - 1)
    HW = H * W
    x_flat = x.reshape(B, Cin, HW).astype(jnp.float32)

    # ---- primary_conv: DynamicConv(inp, init, 1x1) + BN + ReLU --------------
    # routing (tiny glue; plain XLA)
    pooled = jnp.mean(x_flat, axis=-1)                                 # (B, Cin)
    r1 = jax.nn.sigmoid(pooled @ params["route1_w"].T + params["route1_b"])
    w1 = (r1 @ params["expert1"]).reshape(B, init_channels, Cin)       # per-sample 1x1
    s1, b1 = _fused_bn(params["bn1_gamma"], params["bn1_beta"],
                       params["bn1_mean"], params["bn1_var"])
    w1 = w1 * s1[None, :, None]                     # fold BN scale into weights
    x1_flat, pooled2 = pointwise_cond_conv_bn_relu(
        x_flat.astype(jnp.bfloat16),                # bf16 MXU operands, f32 acc
        w1.astype(jnp.bfloat16),
        b1.reshape(init_channels, 1).astype(jnp.float32))

    # ---- cheap_operation: DynamicConv(init, new, 3x3, groups=init) + BN + ReLU
    r2 = jax.nn.sigmoid(pooled2 @ params["route2_w"].T + params["route2_b"])
    w2 = (r2 @ params["expert2"]).reshape(B, new_channels, dw_size * dw_size)
    s2, b2 = _fused_bn(params["bn2_gamma"], params["bn2_beta"],
                       params["bn2_mean"], params["bn2_var"])
    w2 = w2 * s2[None, :, None]                     # fold BN scale into taps

    if ratio == 2:
        # groups == init_channels and new == init: the co -> co // (ratio-1)
        # channel map is the identity, so feed x1 straight in (no HBM
        # duplication / padding round trip).
        x_dw = x1_flat
    else:
        # TODO(synk): express the co -> co // (ratio-1) duplication via a
        # channel-blocked index_map instead of this XLA gather fallback.
        ci_of_co = jnp.arange(new_channels) // (ratio - 1)
        x_dw = jnp.take(x1_flat, ci_of_co, axis=1)

    x2_flat = depthwise_cond_conv_bn_relu(
        x_dw, w2, b2.reshape(new_channels, 1).astype(jnp.float32), H=H, W=W)

    x1 = x1_flat.reshape(B, init_channels, H, W)
    x2 = x2_flat.reshape(B, new_channels, H, W)
    out = jnp.concatenate([x1, x2], axis=1)
    return out[:, :oup, :, :]


# ----------------------------------------------------------------------------
# Pure-JAX reference (for correctness check only)
# ----------------------------------------------------------------------------
def ghost_module_reference(params, x, *, oup, ratio=2, dw_size=3,
                           match_kernel_numerics=False):
    B, Cin, H, W = x.shape
    init_channels = math.ceil(oup / ratio)
    new_channels = init_channels * (ratio - 1)
    x = x.astype(jnp.float32)
    hi = lax.Precision.HIGHEST

    pooled = x.mean(axis=(2, 3))
    r1 = jax.nn.sigmoid(pooled @ params["route1_w"].T + params["route1_b"])
    w1 = (r1 @ params["expert1"]).reshape(B, init_channels, Cin)
    s1, b1 = _fused_bn(params["bn1_gamma"], params["bn1_beta"],
                       params["bn1_mean"], params["bn1_var"])
    if match_kernel_numerics:
        # Mirror the Pallas path: BN scale folded, bf16 MXU operands, f32 acc.
        w1e = (w1 * s1[None, :, None]).astype(jnp.bfloat16).astype(jnp.float32)
        xe = x.astype(jnp.bfloat16).astype(jnp.float32)
        y = jnp.einsum("boi,bihw->bohw", w1e, xe, precision=hi)
        x1 = jnp.maximum(y + b1[None, :, None, None], 0.0)
    else:
        y = jnp.einsum("boi,bihw->bohw", w1, x, precision=hi)
        x1 = jnp.maximum(y * s1[None, :, None, None] + b1[None, :, None, None], 0.0)

    pooled2 = x1.mean(axis=(2, 3))
    r2 = jax.nn.sigmoid(pooled2 @ params["route2_w"].T + params["route2_b"])
    w2 = (r2 @ params["expert2"]).reshape(B, new_channels, dw_size, dw_size)
    ci_of_co = jnp.arange(new_channels) // (ratio - 1)
    x1_sel = x1[:, ci_of_co]
    pad = dw_size // 2
    xp = jnp.pad(x1_sel, ((0, 0), (0, 0), (pad, pad), (pad, pad)))
    acc = jnp.zeros((B, new_channels, H, W), jnp.float32)
    for di in range(dw_size):
        for dj in range(dw_size):
            acc = acc + w2[:, :, di, dj][:, :, None, None] * xp[:, :, di:di + H, dj:dj + W]
    s2, b2 = _fused_bn(params["bn2_gamma"], params["bn2_beta"],
                       params["bn2_mean"], params["bn2_var"])
    x2 = jnp.maximum(acc * s2[None, :, None, None] + b2[None, :, None, None], 0.0)

    out = jnp.concatenate([x1, x2], axis=1)
    return out[:, :oup, :, :]


# ----------------------------------------------------------------------------
if __name__ == "__main__":
    key = jax.random.PRNGKey(0)
    kp, kx = jax.random.split(key)

    B, inp, H, W = 2, 4, 16, 16
    oup = 8  # init_channels = 4, new_channels = 4 (ratio=2)

    params = make_params(kp, inp, oup)
    x = jax.random.normal(kx, (B, inp, H, W), dtype=jnp.float32)

    out = ghost_module_forward(params, x, oup=oup)
    out = jax.block_until_ready(out)
    assert out.shape == (B, oup, H, W), out.shape

    # Exact-logic check: reference mirroring the kernel's bf16-MXU numerics.
    ref_match = ghost_module_reference(params, x, oup=oup, match_kernel_numerics=True)
    err_match = float(jnp.max(jnp.abs(out - ref_match)))
    assert err_match < 1e-3, f"mismatch vs numerics-matched reference: {err_match}"

    # Semantic check vs the pure-f32 reference; the only difference is the
    # documented bf16 quantization of the 1x1 conv's MXU operands.
    ref_f32 = ghost_module_reference(params, x, oup=oup, match_kernel_numerics=False)
    err_f32 = float(jnp.max(jnp.abs(out - ref_f32)))
    assert err_f32 < 1e-1, f"mismatch vs f32 reference: {err_f32}"

    print("KERNEL_OK")
</pallas_src>

<mosaic_0001>
module attributes {stable_mosaic.version = 11 : i64} {
  func.func @_pointwise_conv_bn_relu_pool_kernel(%arg0: i32, %arg1: i32, %arg2: memref<1x4x256xbf16, #tpu.memory_space<vmem>>, %arg3: memref<1x4x4xbf16, #tpu.memory_space<vmem>>, %arg4: memref<4x1xf32, #tpu.memory_space<vmem>>, %arg5: memref<1x4x256xf32, #tpu.memory_space<vmem>>, %arg6: memref<1x4x1xf32, #tpu.memory_space<vmem>>) attributes {dimension_semantics = [#tpu.dimension_semantics<parallel>, #tpu.dimension_semantics<arbitrary>], iteration_bounds = array<i64: 2, 1>, scalar_prefetch = 0 : i64, scratch_operands = 0 : i64, tpu.core_type = #tpu.core_type<tc>, window_params = [{transform_indices = @transform_0, window_bounds = array<i64: 1, 4, 256>}, {transform_indices = @transform_1, window_bounds = array<i64: 1, 4, 4>}, {pipeline_mode = #tpu.pipeline_mode<synchronous>, transform_indices = @transform_2, window_bounds = array<i64: 4, 1>}, {transform_indices = @transform_3, window_bounds = array<i64: 1, 4, 256>}, {transform_indices = @transform_4, window_bounds = array<i64: 1, 4, 1>}]} {
    %c0 = arith.constant 0 : index
    %c0_0 = arith.constant 0 : index
    %c0_1 = arith.constant 0 : index
    %0 = vector.load %arg3[%c0, %c0_0, %c0_1] : memref<1x4x4xbf16, #tpu.memory_space<vmem>>, vector<1x4x4xbf16>
    %1 = vector.shape_cast %0 : vector<1x4x4xbf16> to vector<4x4xbf16>
    %c0_2 = arith.constant 0 : index
    %c0_3 = arith.constant 0 : index
    %c0_4 = arith.constant 0 : index
    %2 = vector.load %arg2[%c0_2, %c0_3, %c0_4] : memref<1x4x256xbf16, #tpu.memory_space<vmem>>, vector<1x4x256xbf16>
    %3 = vector.shape_cast %2 : vector<1x4x256xbf16> to vector<4x256xbf16>
    %cst = arith.constant dense<0.000000e+00> : vector<4x256xf32>
    %4 = tpu.matmul %1, %3, %cst {dimension_numbers = #tpu.dot_dimension_numbers<[1], [0], [0], [1], [0, 0, 1, 1], [], []>} : vector<4x4xbf16>, vector<4x256xbf16>, vector<4x256xf32> -> vector<4x256xf32>
    %c0_5 = arith.constant 0 : index
    %c0_6 = arith.constant 0 : index
    %5 = vector.load %arg4[%c0_5, %c0_6] : memref<4x1xf32, #tpu.memory_space<vmem>>, vector<4x1xf32>
    %6 = vector.broadcast %5 : vector<4x1xf32> to vector<4x256xf32>
    %7 = arith.addf %4, %6 : vector<4x256xf32>
    %cst_7 = arith.constant 0.000000e+00 : f32
    %8 = vector.broadcast %cst_7 : f32 to vector<4x256xf32>
    %9 = arith.maximumf %7, %8 : vector<4x256xf32>
    %c0_8 = arith.constant 0 : index
    %c0_9 = arith.constant 0 : index
    %c0_10 = arith.constant 0 : index
    %10 = vector.load %arg5[%c0_8, %c0_9, %c0_10] : memref<1x4x256xf32, #tpu.memory_space<vmem>>, vector<1x4x256xf32>
    %11 = vector.shape_cast %10 : vector<1x4x256xf32> to vector<4x256xf32>
    %12 = vector.shape_cast %9 : vector<4x256xf32> to vector<1x4x256xf32>
    tpu.vector_store %arg5[%c0_8, %c0_9, %c0_10], %12 {strides = array<i32>} : memref<1x4x256xf32, #tpu.memory_space<vmem>>, vector<1x4x256xf32>,
    %c0_i32 = arith.constant 0 : i32
    %13 = arith.cmpi eq, %arg1, %c0_i32 : i32
    %14 = arith.extui %13 : i1 to i32
    %c0_i32_11 = arith.constant 0 : i32
    %15 = arith.cmpi ne, %14, %c0_i32_11 : i32
    scf.if %15 {
      %cst_20 = arith.constant 0.000000e+00 : f32
      %26 = vector.broadcast %cst_20 : f32 to vector<1x4x1xf32>
      %c0_21 = arith.constant 0 : index
      %c0_22 = arith.constant 0 : index
      %c0_23 = arith.constant 0 : index
      %27 = vector.load %arg6[%c0_21, %c0_22, %c0_23] : memref<1x4x1xf32, #tpu.memory_space<vmem>>, vector<1x4x1xf32>
      tpu.vector_store %arg6[%c0_21, %c0_22, %c0_23], %26 {strides = array<i32>} : memref<1x4x1xf32, #tpu.memory_space<vmem>>, vector<1x4x1xf32>,
    } else {
    }
    %c0_12 = arith.constant 0 : index
    %c0_13 = arith.constant 0 : index
    %c0_14 = arith.constant 0 : index
    %16 = vector.load %arg6[%c0_12, %c0_13, %c0_14] : memref<1x4x1xf32, #tpu.memory_space<vmem>>, vector<1x4x1xf32>
    %17 = vector.shape_cast %16 : vector<1x4x1xf32> to vector<4x1xf32>
    %cst_15 = arith.constant dense<0.000000e+00> : vector<4xf32>
    %18 = vector.multi_reduction <add>, %9, %cst_15 [1] : vector<4x256xf32> to vector<4xf32>
    %19 = vector.shape_cast %18 : vector<4xf32> to vector<4x1xf32>
    %cst_16 = arith.constant 3.906250e-03 : f32
    %20 = vector.broadcast %cst_16 : f32 to vector<4x1xf32>
    %21 = arith.mulf %19, %20 : vector<4x1xf32>
    %22 = arith.addf %17, %21 : vector<4x1xf32>
    %c0_17 = arith.constant 0 : index
    %c0_18 = arith.constant 0 : index
    %c0_19 = arith.constant 0 : index
    %23 = vector.load %arg6[%c0_17, %c0_18, %c0_19] : memref<1x4x1xf32, #tpu.memory_space<vmem>>, vector<1x4x1xf32>
    %24 = vector.shape_cast %23 : vector<1x4x1xf32> to vector<4x1xf32>
    %25 = vector.shape_cast %22 : vector<4x1xf32> to vector<1x4x1xf32>
    tpu.vector_store %arg6[%c0_17, %c0_18, %c0_19], %25 {strides = array<i32>} : memref<1x4x1xf32, #tpu.memory_space<vmem>>, vector<1x4x1xf32>,
    return
  }
  func.func @transform_0(%arg0: i32, %arg1: i32) -> (i32, i32, i32) {
    %c0_i32 = arith.constant 0 : i32
    %c0_i32_0 = arith.constant 0 : i32
    return %arg0, %c0_i32, %arg1 : i32, i32, i32
  }
  func.func @transform_1(%arg0: i32, %arg1: i32) -> (i32, i32, i32) {
    %c0_i32 = arith.constant 0 : i32
    %c0_i32_0 = arith.constant 0 : i32
    %c0_i32_1 = arith.constant 0 : i32
    return %arg0, %c0_i32, %c0_i32_0 : i32, i32, i32
  }
  func.func @transform_2(%arg0: i32, %arg1: i32) -> (i32, i32) {
    %c0_i32 = arith.constant 0 : i32
    %c0_i32_0 = arith.constant 0 : i32
    %c0_i32_1 = arith.constant 0 : i32
    return %c0_i32, %c0_i32_0 : i32, i32
  }
  func.func @transform_3(%arg0: i32, %arg1: i32) -> (i32, i32, i32) {
    %c0_i32 = arith.constant 0 : i32
    %c0_i32_0 = arith.constant 0 : i32
    return %arg0, %c0_i32, %arg1 : i32, i32, i32
  }
  func.func @transform_4(%arg0: i32, %arg1: i32) -> (i32, i32, i32) {
    %c0_i32 = arith.constant 0 : i32
    %c0_i32_0 = arith.constant 0 : i32
    %c0_i32_1 = arith.constant 0 : i32
    return %arg0, %c0_i32, %c0_i32_0 : i32, i32, i32
  }
}

</mosaic_0001>

<llo_original>
// kernel: tpu_custom_call.1
$region0: #{tpu_custom_call.1}
  #allocation0 [shape = 'u32[]', space=smem, size = 0x4, offset = 0x4, fixed_abs, tag = 'smem constant byte address 0x4 - core index']
  #allocation1 [shape = 'u32[144,128]{1,0:T(1,128)}', space=vmem, size = 0x12000, scoped, tag = 'internal scratch']
  %s0 = inlined_call_operand.hbm [shape: bf16[2,4,256], index: 0, kind: input, shape index: {}]
  %s1 = inlined_call_operand.vmem [shape: bf16[2,4,4], index: 1, kind: input, shape index: {}]
  %s2 = inlined_call_operand.vmem [shape: f32[4,1], index: 2, kind: input, shape index: {}]
  %s3 = inlined_call_operand.hbm [shape: f32[2,4,256], index: 3, kind: output, shape index: {0}]
  %s4 = inlined_call_operand.vmem [shape: f32[2,4,1], index: 4, kind: output, shape index: {1}]
  %5 = xla_tuple %s3, %s4
  %s6 = sld [smem:[#allocation0]]
  $region61: #{tpu_custom_call.1} parent=0
    _
  %s8 = ssub.s32 1, %s6
  %s9 = scalar_select 0, %s8, %s6
  $region1: #{tpu_custom_call.1} parent=0
    #allocation2 [shape = 'u8[4096]{0}', space=vmem, size = 0x1000, scoped, tag = 'input window, operand 0']
    #allocation3 [shape = 's32[2]{0}', space=sflag, size = 0x8, scoped, tag = 'scoped memory for tpu_custom_call.1']
    #allocation4 [shape = 's32[2]{0}', space=sflag, size = 0x8, scoped, tag = 'scoped memory for tpu_custom_call.1']
    #allocation5 [shape = 'u8[8192]{0}', space=vmem, size = 0x2000, scoped, tag = 'output window, operand 0']
    %10 = vsyncpa [#allocation3], 0
    %s11 = scalar_lea.sflag [#allocation3], 1
    %12 = vsyncpa %s11, 0
    %13 = vsyncpa [#allocation4], 0
    %s14 = scalar_lea.sflag [#allocation4], 1
    %15 = vsyncpa %s14, 0
    loop: start=0, step=1, limit=4
    $region2: #{tpu_custom_call.1} parent=1 // loop_pre_header
      _
    $region3: #{tpu_custom_call.1} parent=1 // loop_header
      %s17 = sphi 0, %s21
      %p18 = scmp.ge.s32.totalorder %s17, 4
      %s24 = sphi 0, %s36
      %s25 = sphi 0, %s32
      %s26 = sphi 0, %s24
      %s27 = sphi 0, %s25
      %s28 = sphi 0, %s26
      %s29 = sphi 0, %s27
      %s41 = sphi 0, %s43
      %s44 = sphi 0, %s41
      %s45 = sphi 0, %s44
      %s61 = sphi 0, %s45
      %s67 = sphi 0, %s69
      %s70 = sphi 0, %s67
      %s71 = sphi 0, %s70
      %s87 = sphi 0, %s71
      %s91 = sphi 0, %s91
      %s93 = sphi 0, %s91
      %s94 = sphi 0, %s93
      %s108 = sphi 0, %s94
      %s116 = sphi 0, %s118
      %s119 = sphi 0, %s116
      %s120 = sphi 0, %s119
      %s136 = sphi 0, %s120
      %s142 = sphi 0, %s144
      %s145 = sphi 0, %s142
      %s146 = sphi 0, %s145
      %s162 = sphi 0, %s146
    $region4: #{tpu_custom_call.1} parent=1 // loop_header_branch
      %20 = sbr.rel (%p18) target = $region8
    $region5: #{tpu_custom_call.1} parent=1 // loop_body
      %s22 = ssub.s32 %s17, 1
      %s23 = ssub.s32 %s17, 2
      %s30 = sadd.s32 1, %s25
      %p31 = scmp.ge.s32.totalorder %s30, 1
      %s32 = scalar_select %p31, 0, %s30
      %s33 = sadd.s32 1, %s24
      %s34 = scalar_select %p31, %s33, %s24
      %p35 = scmp.ge.s32.totalorder %s34, 2
      %s36 = scalar_select %p35, 0, %s34
      %s37 = ssub.s32 %s24, %s36
      %s38 = ssub.s32 %s25, %s32
      %s39 = sor.u32 %s37, %s38
      %p40 = scmp.eq.s32.totalorder %s39, 0
      %s42 = sadd.s32 %s41, 1
      %s43 = scalar_select %p40, %s41, %s42
      %p46 = pneg %p40
      %p47 = scmp.eq.s32.totalorder %s17, 1
      %p48 = por %p46, %p47
      %p49 = scmp.ne.s32.totalorder %s41, %s44
      %p50 = scmp.eq.s32.totalorder %s17, 0
      %p51 = por %p49, %p50
      %p52 = scmp.ne.s32.totalorder %s41, %s44
      %p53 = scmp.eq.s32.totalorder %s22, 1
      %p54 = por %p52, %p53
      %p55 = scmp.ne.s32.totalorder %s44, %s45
      %p56 = scmp.eq.s32.totalorder %s22, 0
      %p57 = por %p55, %p56
      %p58 = scmp.ne.s32.totalorder %s44, %s45
      %p59 = scmp.eq.s32.totalorder %s23, 1
      %p60 = por %p58, %p59
      %p62 = scmp.ne.s32.totalorder %s45, %s61
      %p63 = scmp.eq.s32.totalorder %s23, 0
      %p64 = por %p62, %p63
      %s65 = ssub.s32 %s24, %s36
      %p66 = scmp.eq.s32.totalorder %s65, 0
      %s68 = sadd.s32 %s67, 1
      %s69 = scalar_select %p66, %s67, %s68
      %p72 = pneg %p66
      %p73 = scmp.eq.s32.totalorder %s17, 1
      %p74 = por %p72, %p73
      %p75 = scmp.ne.s32.totalorder %s67, %s70
      %p76 = scmp.eq.s32.totalorder %s17, 0
      %p77 = por %p75, %p76
      %p78 = scmp.ne.s32.totalorder %s67, %s70
      %p79 = scmp.eq.s32.totalorder %s22, 1
      %p80 = por %p78, %p79
      %p81 = scmp.ne.s32.totalorder %s70, %s71
      %p82 = scmp.eq.s32.totalorder %s22, 0
      %p83 = por %p81, %p82
      %p84 = scmp.ne.s32.totalorder %s70, %s71
      %p85 = scmp.eq.s32.totalorder %s23, 1
      %p86 = por %p84, %p85
      %p88 = scmp.ne.s32.totalorder %s71, %s87
      %p89 = scmp.eq.s32.totalorder %s23, 0
      %p90 = por %p88, %p89
      %s92 = sadd.s32 %s91, 1
      %p95 = scmp.eq.s32.totalorder %s17, 1
      %p96 = scmp.ne.s32.totalorder %s91, %s93
      %p97 = scmp.eq.s32.totalorder %s17, 0
      %p98 = por %p96, %p97
      %p99 = scmp.ne.s32.totalorder %s91, %s93
      %p100 = scmp.eq.s32.totalorder %s22, 1
      %p101 = por %p99, %p100
      %p102 = scmp.ne.s32.totalorder %s93, %s94
      %p103 = scmp.eq.s32.totalorder %s22, 0
      %p104 = por %p102, %p103
      %p105 = scmp.ne.s32.totalorder %s93, %s94
      %p106 = scmp.eq.s32.totalorder %s23, 1
      %p107 = por %p105, %p106
      %p109 = scmp.ne.s32.totalorder %s94, %s108
      %p110 = scmp.eq.s32.totalorder %s23, 0
      %p111 = por %p109, %p110
      %s112 = ssub.s32 %s24, %s36
      %s113 = ssub.s32 %s25, %s32
      %s114 = sor.u32 %s112, %s113
      %p115 = scmp.eq.s32.totalorder %s114, 0
      %s117 = sadd.s32 %s116, 1
      %s118 = scalar_select %p115, %s116, %s117
      %p121 = pneg %p115
      %p122 = scmp.eq.s32.totalorder %s17, 1
      %p123 = por %p121, %p122
      %p124 = scmp.ne.s32.totalorder %s116, %s119
      %p125 = scmp.eq.s32.totalorder %s17, 0
      %p126 = por %p124, %p125
      %p127 = scmp.ne.s32.totalorder %s116, %s119
      %p128 = scmp.eq.s32.totalorder %s22, 1
      %p129 = por %p127, %p128
      %p130 = scmp.ne.s32.totalorder %s119, %s120
      %p131 = scmp.eq.s32.totalorder %s22, 0
      %p132 = por %p130, %p131
      %p133 = scmp.ne.s32.totalorder %s119, %s120
      %p134 = scmp.eq.s32.totalorder %s23, 1
      %p135 = por %p133, %p134
      %p137 = scmp.ne.s32.totalorder %s120, %s136
      %p138 = scmp.eq.s32.totalorder %s23, 0
      %p139 = por %p137, %p138
      %s140 = ssub.s32 %s24, %s36
      %p141 = scmp.eq.s32.totalorder %s140, 0
      %s143 = sadd.s32 %s142, 1
      %s144 = scalar_select %p141, %s142, %s143
      %p147 = pneg %p141
      %p148 = scmp.eq.s32.totalorder %s17, 1
      %p149 = por %p147, %p148
      %p150 = scmp.ne.s32.totalorder %s142, %s145
      %p151 = scmp.eq.s32.totalorder %s17, 0
      %p152 = por %p150, %p151
      %p153 = scmp.ne.s32.totalorder %s142, %s145
      %p154 = scmp.eq.s32.totalorder %s22, 1
      %p155 = por %p153, %p154
      %p156 = scmp.ne.s32.totalorder %s145, %s146
      %p157 = scmp.eq.s32.totalorder %s22, 0
      %p158 = por %p156, %p157
      %p159 = scmp.ne.s32.totalorder %s145, %s146
      %p160 = scmp.eq.s32.totalorder %s23, 1
      %p161 = por %p159, %p160
      %p163 = scmp.ne.s32.totalorder %s146, %s162
      %p164 = scmp.eq.s32.totalorder %s23, 0
      %p165 = por %p163, %p164
      %p166 = scmp.le.s32.totalorder 1, %s17
      %p167 = scmp.lt.s32.totalorder %s17, 3
      %p168 = pnand %p166, %p167
      %p169 = pneg %p168
      // Predicated region
      $region9: #{tpu_custom_call.1} parent=5 // pred_check
        _
      $region10: #{tpu_custom_call.1} parent=5 // pred_check_branch
        %171 = sbr.rel (%p168) target = $region12
      $region11: #{tpu_custom_call.1} parent=5 // pred_region
        %s172 = ssub.s32 %s17, 1
        // Predicated region
        $region13: #{tpu_custom_call.1} parent=11 // pred_check
          %p173 = pneg %p104
        $region14: #{tpu_custom_call.1} parent=11 // pred_check_branch
          %175 = sbr.rel (%p173) target = $region16
        $region15: #{tpu_custom_call.1} parent=11 // pred_region
          _
        $region16: #{tpu_custom_call.1} parent=11 // pred_fallthru
          _
      $region12: #{tpu_custom_call.1} parent=5 // pred_fallthru
        _
      %p176 = scmp.lt.s32.totalorder %s17, 2
      // Predicated region
      $region17: #{tpu_custom_call.1} parent=5 // pred_check
        %p177 = pneg %p176
      $region18: #{tpu_custom_call.1} parent=5 // pred_check_branch
        %179 = sbr.rel (%p177) target = $region20
      $region19: #{tpu_custom_call.1} parent=5 // pred_region
        // Predicated region
        $region21: #{tpu_custom_call.1} parent=19 // pred_check
          %p180 = pneg %p51
        $region22: #{tpu_custom_call.1} parent=19 // pred_check_branch
          %182 = sbr.rel (%p180) target = $region24
        $region23: #{tpu_custom_call.1} parent=19 // pred_region
          %s183 = sand.u32 %s41, 1
          %s184 = scalar_lea.sflag [#allocation3], %s183
          %s185 = sand.u32 %s41, 1
          %s186 = smul.addr %s185, 4
          %s187 = scalar_lea.vmem [#allocation2], %s186
          %s188 = smul.u32 2, %s25
          %s190 = ssub.s32 64, 64
          %191 = vsyncadd %s184, %s190
          %s192 = smul.addr %s24, 2
          %s193 = sadd.s32 %s188, %s192
          %s194 = smul.addr %s193, 32
          %s195 = scalar_lea.hbm %s0, %s194
          %s197 = sshll.u32 %s187, 4
          %s198 = int_to_ptr.vmem [resolvable:$true] %s197
          %200 = dma.hbm_to_vmem [thread:$0]  %s195, 64, %s198, %s184
        $region24: #{tpu_custom_call.1} parent=19 // pred_fallthru
          _
        // Predicated region
        $region25: #{tpu_custom_call.1} parent=19 // pred_check
          %p201 = pneg %p77
        $region26: #{tpu_custom_call.1} parent=19 // pred_check_branch
          %203 = sbr.rel (%p201) target = $region28
        $region27: #{tpu_custom_call.1} parent=19 // pred_region
          %p204 = scmp.lt.s32.totalorder %s24, 1
          %s205 = scalar_select %p204, %s24, 1
          %s206 = smul.addr %s205, 2
          %s207 = scalar_lea.vmem %s1, %s206
        $region28: #{tpu_custom_call.1} parent=19 // pred_fallthru
          _
      $region20: #{tpu_custom_call.1} parent=5 // pred_fallthru
        _
      %p208 = scmp.le.s32.totalorder 1, %s17
      %p209 = scmp.lt.s32.totalorder %s17, 3
      %p210 = pnand %p208, %p209
      %p211 = pneg %p210
      // Predicated region
      $region29: #{tpu_custom_call.1} parent=5 // pred_check
        _
      $region30: #{tpu_custom_call.1} parent=5 // pred_check_branch
        %213 = sbr.rel (%p210) target = $region32
      $region31: #{tpu_custom_call.1} parent=5 // pred_region
        %s214 = ssub.s32 %s17, 1
        %s215 = sand.u32 %s44, 1
        %s216 = scalar_lea.sflag [#allocation3], %s215
        %s217 = sand.u32 %s44, 1
        %s218 = smul.addr %s217, 4
        %s219 = scalar_lea.vmem [#allocation2], %s218
        // Predicated region
        $region33: #{tpu_custom_call.1} parent=31 // pred_check
          %p220 = pneg %p57
        $region34: #{tpu_custom_call.1} parent=31 // pred_check_branch
          %222 = sbr.rel (%p220) target = $region36
        $region35: #{tpu_custom_call.1} parent=31 // pred_region
          %223 = dma.done %s216, 64
        $region36: #{tpu_custom_call.1} parent=31 // pred_fallthru
          _
        %s224 = sand.u32 %s44, 1
        %s225 = scalar_lea.sflag [#allocation3], %s224
        %s226 = sand.u32 %s44, 1
        %s227 = smul.addr %s226, 4
        %s228 = scalar_lea.vmem [#allocation2], %s227
        %p229 = pneg %p57
        %p230 = pneg %p54
        %p231 = scmp.lt.s32.totalorder %s26, 1
        %s232 = scalar_select %p231, %s26, 1
        %s233 = smul.addr %s232, 2
        %s234 = scalar_lea.vmem %s1, %s233
        %p235 = pneg %p83
        %p236 = pneg %p80
        %p237 = pneg %p104
        %p238 = pneg %p101
        %p239 = pneg %p132
        %p240 = pneg %p129
        %s241 = sand.u32 %s119, 1
        %s242 = scalar_lea.sflag [#allocation4], %s241
        %s243 = sand.u32 %s119, 1
        %s244 = smul.addr %s243, 8
        %s245 = scalar_lea.vmem [#allocation5], %s244
        %p246 = pneg %p158
        %p247 = pneg %p155
        %p248 = scmp.lt.s32.totalorder %s26, 1
        %s249 = scalar_select %p248, %s26, 1
        %s250 = smul.addr %s249, 4
        %s251 = scalar_lea.vmem %s4, %s250
        %s252 = smul.u32 2, %s27
        %p253 = scmp.lt.s32.totalorder %s26, 1
        %s254 = scalar_select %p253, %s26, 1
        %s255 = smul.addr %s254, 2
        %s256 = scalar_lea.vmem %s1, %s255
        %s257 = smul.u32 2, %s27
        %p258 = scmp.lt.s32.totalorder %s26, 1
        %s259 = scalar_select %p258, %s26, 1
        %s260 = smul.addr %s259, 4
        %s261 = scalar_lea.vmem %s4, %s260
        %v263 = vld [vmem:[%s256] sm:$0x3]
        %v264 = vld [vmem:[%s219] sm:$0xf]
        %v265 = vld [vmem:[%s2] sm:$0xf]
        %267 = vset.pattern.permute.xlu0 0
        %268 = vperm.xlu0 %267, %v265
        %v269 = vpop.permute.xlu0 %268
        %v273 = vunpack.c.l.s4 1983009808
        %v274 = vunpack.c.0.s8 %v273
        %v275 = vlaneseq
        %v276 = vshrl.u32 %v275, 7
        %v277 = vsub.s32 %v274, %v276
        %v278 = vrot.slane %v264, %v277
        %v279 = vcombine.high %v278, %v278
        %vm280 = vcmask 31744
        %v282 = vsel %vm280, %v263, 0
        %vm284 = vcmask 1041408
        %v286 = vsel %vm284, %v278, 0
        %v289 = vsel %vm284, %v279, 0
        %291 = vmatprep.subr.bf16.mxu0 %v289
        %292 = vmatpush1.bf16.msra.mxu0 %v286
        %293 = vmatprep.subr.bf16.mxu0 0
        %294 = vmatpush1.bf16.msra.mxu0 0
        %295 = vmatprep.subr.bf16.mxu0 0
        %296 = vmatpush1.bf16.msra.mxu0 0
        %297 = vmatprep.subr.bf16.mxu0 0
        %298 = vmatpush1.bf16.msra.mxu0 0
        %299 = vmatprep.subr.bf16.mxu0 0
        %300 = vmatpush1.bf16.msra.mxu0 0
        %301 = vmatprep.subr.bf16.mxu0 0
        %302 = vmatpush1.bf16.msra.mxu0 0
        %303 = vmatprep.subr.bf16.mxu0 0
        %304 = vmatpush1.bf16.msra.mxu0 0
        %305 = vmatprep.subr.bf16.mxu0 0
        %306 = vmatpush1.bf16.msra.mxu0 0
        %307 = vmatprep.subr.bf16.mxu0 0
        %308 = vmatpush1.bf16.msra.mxu0 0
        %309 = vmatprep.subr.bf16.mxu0 0
        %310 = vmatpush1.bf16.msra.mxu0 0
        %311 = vmatprep.subr.bf16.mxu0 0
        %312 = vmatpush1.bf16.msra.mxu0 0
        %313 = vmatprep.subr.bf16.mxu0 0
        %314 = vmatpush1.bf16.msra.mxu0 0
        %315 = vmatprep.subr.bf16.mxu0 0
        %316 = vmatpush1.bf16.msra.mxu0 0
        %317 = vmatprep.subr.bf16.mxu0 0
        %318 = vmatpush1.bf16.msra.mxu0 0
        %319 = vmatprep.subr.bf16.mxu0 0
        %320 = vmatpush1.bf16.msra.mxu0 0
        %321 = vmatprep.subr.bf16.mxu0 0
        %322 = vmatpush1.bf16.msra.mxu0 0
        %323 = vmatprep.mubr.bf16.mxu0 0
        %324 = vmatmul.mubr.bf16.gmra.mrb[0].mxu0 %v282
        %v325 = vpop.f32.mrb[0].mxu0
        %v326 = vadd.f32 %v269, %v325
        %v327 = vpop.f32.mrb[0].mxu0
        %v328 = vadd.f32 %v269, %v327
        %v329 = vpop.f32.mrb[0].mxu0
        %v330 = vpop.f32.mrb[0].mxu0
        %331 = vdwg.mxu0
        %v332 = vmax.f32 %v326, 0.0
        %v333 = vmax.f32 %v328, 0.0
        %v336 = vcombine.low %v332, %v333
        %338 = vst [vmem:[%s245] sm:$0xff] %v336
        %p339 = scmp.eq.s32.totalorder %s27, 0
        // Predicated region
        $region37: #{tpu_custom_call.1} parent=31 // pred_check
          %p340 = pneg %p339
        $region38: #{tpu_custom_call.1} parent=31 // pred_check_branch
          %342 = sbr.rel (%p340) target = $region40
        $region39: #{tpu_custom_call.1} parent=31 // pred_region
          %vm343 = vcmask 3072
          %344 = vst.msk [vmem:[%s261] sm:$0xf] %vm343, 0.0
        $region40: #{tpu_custom_call.1} parent=31 // pred_fallthru
          _
        %v345 = vld [vmem:[%s261] sm:$0xf]
        %vm346 = vcmask 1043456
        %v347 = vsel %vm346, %v332, 0.0
        %v348 = vsel %vm346, %v333, 0.0
        %v349 = vadd.f32 %v347, %v348
        %350 = vadd.xlane.f32.xlu0 %v349
        %v351 = vpop.xlane.xlu0 %350
        %v352 = vmul.f32 %v351, 0.00390625
        %v353 = vadd.f32 %v345, %v352
        %vm354 = vcmask 3072
        %355 = vst.msk [vmem:[%s261] sm:$0xf] %vm354, %v353
        %s356 = sand.u32 %s119, 1
        %s357 = scalar_lea.sflag [#allocation4], %s356
        %s358 = sand.u32 %s119, 1
        %s359 = smul.addr %s358, 8
        %s360 = scalar_lea.vmem [#allocation5], %s359
        %p361 = scmp.lt.s32.totalorder %s26, 1
        %s362 = scalar_select %p361, %s26, 1
        %s363 = smul.addr %s362, 4
        %s364 = scalar_lea.vmem %s4, %s363
        // Predicated region
        $region41: #{tpu_custom_call.1} parent=31 // pred_check
          %p365 = pneg %p129
        $region42: #{tpu_custom_call.1} parent=31 // pred_check_branch
          %367 = sbr.rel (%p365) target = $region44
        $region43: #{tpu_custom_call.1} parent=31 // pred_region
          %s368 = smul.u32 2, %s27
          %s370 = ssub.s32 128, 128
          %371 = vsyncadd %s357, %s370
          %s372 = smul.addr %s26, 2
          %s373 = sadd.s32 %s368, %s372
          %s374 = smul.addr %s373, 64
          %s375 = scalar_lea.hbm %s3, %s374
          %s377 = sshll.u32 %s360, 4
          %s378 = int_to_ptr.vmem [resolvable:$true] %s377
          %380 = dma.vmem_to_hbm [thread:$0]  %s378, 128, %s375, %s357
        $region44: #{tpu_custom_call.1} parent=31 // pred_fallthru
          _
        // Predicated region
        $region45: #{tpu_custom_call.1} parent=31 // pred_check
          %p381 = pneg %p155
        $region46: #{tpu_custom_call.1} parent=31 // pred_check_branch
          %383 = sbr.rel (%p381) target = $region48
        $region47: #{tpu_custom_call.1} parent=31 // pred_region
          _
        $region48: #{tpu_custom_call.1} parent=31 // pred_fallthru
          _
      $region32: #{tpu_custom_call.1} parent=5 // pred_fallthru
        _
      %p384 = scmp.le.s32.totalorder 2, %s17
      // Predicated region
      $region49: #{tpu_custom_call.1} parent=5 // pred_check
        %p385 = pneg %p384
      $region50: #{tpu_custom_call.1} parent=5 // pred_check_branch
        %387 = sbr.rel (%p385) target = $region52
      $region51: #{tpu_custom_call.1} parent=5 // pred_region
        %s388 = ssub.s32 %s17, 2
        // Predicated region
        $region53: #{tpu_custom_call.1} parent=51 // pred_check
          %p389 = pneg %p135
        $region54: #{tpu_custom_call.1} parent=51 // pred_check_branch
          %391 = sbr.rel (%p389) target = $region56
        $region55: #{tpu_custom_call.1} parent=51 // pred_region
          %s392 = sand.u32 %s120, 1
          %s393 = scalar_lea.sflag [#allocation4], %s392
          %s394 = sand.u32 %s120, 1
          %s395 = smul.addr %s394, 8
          %s396 = scalar_lea.vmem [#allocation5], %s395
          %397 = dma.done %s393, 128
        $region56: #{tpu_custom_call.1} parent=51 // pred_fallthru
          _
        // Predicated region
        $region57: #{tpu_custom_call.1} parent=51 // pred_check
          %p398 = pneg %p161
        $region58: #{tpu_custom_call.1} parent=51 // pred_check_branch
          %400 = sbr.rel (%p398) target = $region60
        $region59: #{tpu_custom_call.1} parent=51 // pred_region
          %p401 = scmp.lt.s32.totalorder %s28, 1
          %s402 = scalar_select %p401, %s28, 1
          %s403 = smul.addr %s402, 4
          %s404 = scalar_lea.vmem %s4, %s403
        $region60: #{tpu_custom_call.1} parent=51 // pred_fallthru
          _
      $region52: #{tpu_custom_call.1} parent=5 // pred_fallthru
        _
    $region6: #{tpu_custom_call.1} parent=1 // loop_footer
      %s21 = sadd.s32 1, %s17
    $region7: #{tpu_custom_call.1} parent=1 // loop_footer_branch
      %16 = sbr.rel target = $region3
    $region8: #{tpu_custom_call.1} parent=1 // loop_exit
      _
    %405 = vsyncpa [#allocation3], 1
    %s406 = scalar_lea.sflag [#allocation3], 1
    %407 = vsyncpa %s406, 1
    %408 = vsyncpa [#allocation4], 1
    %s409 = scalar_lea.sflag [#allocation4], 1
    %410 = vsyncpa %s409, 1

</llo_original>
